<compile_context>
chip_gen: v7x
topology: tpu7x:2x2x1
jax: 0.10.0
libtpu: 0.0.40
codegen_flags: <defaults>
</compile_context>

<pallas_src>
import jax
import jax.numpy as jnp
from jax import lax
from jax.experimental import pallas as pl
from jax.experimental.pallas import tpu as pltpu


def _round_up(x, n):
    return (x + n - 1) // n * n


def _make_spectral_kernel(tb, c_unroll):
    """out[b, d, p] = sum_c complex(a[b, c, p]) * complex(w[c, d, p]).

    Block shapes per grid step (q = lane chunk, b = batch tile):
      a_ref : (tb, 2, C, ppc)   activations, axis 1 = [real, imag]
      w_ref : (C, 2, D, ppc)    weights (grid-invariant along the batch axis)
      o_ref : (tb, 2, D, ppc)   output, written exactly once per grid step
    """

    def kernel(a_ref, w_ref, o_ref):
        C = w_ref.shape[0]
        acc_shape = o_ref.shape[2:]               # (D, ppc)

        for bi in range(tb):                      # static unroll; tb <= 8
            def contract(c, carry, bi=bi):
                acc_re, acc_im = carry
                # (1, ppc) activation rows, broadcast over the D sublanes of the
                # weight planes inside the multiply (cast to f32 right after the
                # load so bf16 operands still accumulate in f32 — v5e-safe).
                a_re = a_ref[bi, 0, pl.ds(c, 1)].astype(jnp.float32)
                a_im = a_ref[bi, 1, pl.ds(c, 1)].astype(jnp.float32)
                w_c = w_ref[c].astype(jnp.float32)        # (2, D, ppc)
                w_re = w_c[0]
                w_im = w_c[1]
                acc_re = acc_re + (a_re * w_re - a_im * w_im)
                acc_im = acc_im + (a_im * w_re + a_re * w_im)
                return acc_re, acc_im

            acc0 = (jnp.zeros(acc_shape, jnp.float32),
                    jnp.zeros(acc_shape, jnp.float32))
            if C <= 8:
                acc_re, acc_im = acc0
                for c in range(C):
                    acc_re, acc_im = contract(c, (acc_re, acc_im))
            else:
                # bounded unroll (no full static unroll for large / awkward C:
                # keeps vreg pressure and code size in check).
                acc_re, acc_im = lax.fori_loop(0, C, contract, acc0,
                                               unroll=c_unroll)
            o_ref[bi, 0] = acc_re
            o_ref[bi, 1] = acc_im

    return kernel


def prepare_spectral_weights(weights1, weights2, operand_dtype=jnp.float32):
    """One-time packing of (weights1, weights2) into the kernel layout.

    Input : two (D, Cw, m, m, 2) tensors (PyTorch parameter layout).
    Output: (Cw, 2, D, Pp) — Cw is the contracted channel (= weights dim 1),
    axis 1 = [real, imag], D is the output channel (= weights dim 0), last axis
    fuses both spectral corners (2*m*m) zero-padded to a multiple of 128 lanes.
    Hoisted out of the forward pass so the transpose/concat over the full weight
    tensor is paid once, not per call.
    """
    D, Cw, m, m2, two = weights1.shape
    assert m == m2 and two == 2 and weights2.shape == weights1.shape
    P = m * m
    Pc = 2 * P
    Pp = _round_up(Pc, 128)

    def planes(w):                                # (D, Cw, m, m, 2) -> (2, D, Cw, P)
        return jnp.moveaxis(w, -1, 0).reshape(2, D, Cw, P)

    w = jnp.concatenate([planes(weights1), planes(weights2)], axis=-1)  # (2,D,Cw,Pc)
    if Pp > Pc:
        w = jnp.pad(w, ((0, 0), (0, 0), (0, 0), (0, Pp - Pc)))
    return jnp.transpose(w, (2, 0, 1, 3)).astype(operand_dtype)         # (Cw,2,D,Pp)


def spectral_conv2d_forward(x, w_packed, n_modes, *, operand_dtype=jnp.float32):
    """JAX/Pallas port of SpectralConv2d.forward (PyTorch NCHW input).

    `w_packed` is the output of `prepare_spectral_weights` (one-time preprocessing).
    """
    B, C, H, W = x.shape
    Wf = W // 2 + 1
    m = int(n_modes)
    P = m * m
    Pc = 2 * P                                   # both spectral corners on lanes
    Cw, two, D, Pp = w_packed.shape
    assert two == 2
    assert Cw == C, "einsum 'bctq,dctq->bdtq' contracts x channels with weights dim 1"
    assert Pp == _round_up(Pc, 128), "w_packed does not match n_modes"
    assert H >= 2 * m and Wf >= m, "n_modes too large for the spatial size"

    # torch.rfft(x, 2, normalized=True, onesided=True) == rfft2(..., norm='ortho')
    x_ft = jnp.fft.rfft2(x, norm="ortho")                        # (B, C, H, Wf) c64

    # Fuse the two corners on the lane axis, split re/im on a leading axis (one
    # input array -> one DMA descriptor per grid step), zero-pad lanes to 128.
    a1 = x_ft[:, :, :m, :m].reshape(B, C, P)
    a2 = x_ft[:, :, H - m:, :m].reshape(B, C, P)
    a = jnp.concatenate([a1, a2], axis=-1)                       # (B, C, Pc)
    a = jnp.stack([jnp.real(a), jnp.imag(a)], axis=1)            # (B, 2, C, Pc) f32
    if Pp > Pc:
        a = jnp.pad(a, ((0, 0), (0, 0), (0, 0), (0, Pp - Pc)))
    a = a.astype(operand_dtype)
    w = w_packed.astype(operand_dtype)

    # --- tiling -------------------------------------------------------------
    ebytes = jnp.dtype(operand_dtype).itemsize
    tb = min(B, 8)                               # batch tile folded into every block
    while B % tb:
        tb -= 1

    # Lane chunk: the largest multiple of 128 dividing Pp such that (a) the two
    # f32 register accumulators stay within ~32 vregs and (b) the resident weight
    # block stays well inside VMEM (v7x has only 64 MiB per TensorCore).
    acc_budget = 128 * 1024
    w_budget = 16 * 1024 * 1024
    ppc = 128
    for cand in range(Pp, 0, -128):
        if Pp % cand:
            continue
        if 2 * D * cand * 4 <= acc_budget and C * 2 * D * cand * ebytes <= w_budget:
            ppc = cand
            break
    n_q = Pp // ppc
    n_b = B // tb
    # TODO(synk): for very large D the accumulators exceed the vreg budget even at
    # ppc=128 — tile D (extra grid axis) or accumulate into a VMEM scratch instead.

    a_block = tb * 2 * C * ppc * ebytes
    w_block = C * 2 * D * ppc * ebytes
    o_block = tb * 2 * D * ppc * 4
    vmem_need = 2 * (a_block + w_block + o_block)       # default double-buffering
    vmem_limit = int(min(max(vmem_need + (8 << 20), 32 << 20), 64 << 20))
    # TODO(synk): on v7x pin the grid-invariant weight block to single-buffering
    # (pl.Buffered(1)) once pipeline_mode is available in the deployed JAX.

    kernel = _make_spectral_kernel(tb, c_unroll=min(8, C))

    # Grid order (lane-chunk outer, batch inner): the weight index map does not
    # depend on the batch axis, so each weight chunk is DMA'd from HBM exactly
    # once and stays VMEM-resident across all batch tiles.
    out = pl.pallas_call(
        kernel,
        out_shape=jax.ShapeDtypeStruct((B, 2, D, Pp), jnp.float32),
        grid=(n_q, n_b),
        in_specs=[
            pl.BlockSpec((tb, 2, C, ppc), lambda q, b: (b, 0, 0, q)),
            pl.BlockSpec((C, 2, D, ppc), lambda q, b: (0, 0, 0, q)),
        ],
        out_specs=pl.BlockSpec((tb, 2, D, ppc), lambda q, b: (b, 0, 0, q)),
        compiler_params=pltpu.CompilerParams(
            # No cross-step reduction remains in the grid (channels contracted
            # in-kernel), so both axes are parallel (megacore sharding on v7x).
            dimension_semantics=("parallel", "parallel"),
            vmem_limit_bytes=vmem_limit,
        ),
    )(a, w)

    # --- unpack: strip lane padding, recombine complex, assemble out_ft ------
    o = out[..., :Pc]
    o_c = (o[:, 0] + 1j * o[:, 1]).astype(jnp.complex64)        # (B, D, Pc)
    o1 = o_c[..., :P].reshape(B, D, m, m)
    o2 = o_c[..., P:].reshape(B, D, m, m)

    zcols = jnp.zeros((B, D, m, Wf - m), jnp.complex64)
    top = jnp.concatenate([o1, zcols], axis=-1)                  # rows [0, m)
    bot = jnp.concatenate([o2, zcols], axis=-1)                  # rows [H-m, H)
    mid = jnp.zeros((B, D, H - 2 * m, Wf), jnp.complex64)        # rows [m, H-m)
    out_ft = jnp.concatenate([top, mid, bot], axis=2)            # (B, D, H, Wf)

    # torch.irfft(out_ft, 2, normalized=True, onesided=True, signal_sizes=(H, W))
    return jnp.fft.irfft2(out_ft, s=(H, W), norm="ortho").astype(jnp.float32)


def _reference_forward(x, weights1, weights2, n_modes):
    """Pure-JAX reference reproducing the PyTorch module's semantics."""
    B, C, H, W = x.shape
    m = n_modes
    Wf = W // 2 + 1
    x_ft = jnp.fft.rfft2(x, norm="ortho")
    w1 = weights1[..., 0] + 1j * weights1[..., 1]
    w2 = weights2[..., 0] + 1j * weights2[..., 1]
    o1 = jnp.einsum("bctq,dctq->bdtq", x_ft[:, :, :m, :m], w1)
    o2 = jnp.einsum("bctq,dctq->bdtq", x_ft[:, :, H - m:, :m], w2)
    out_ft = jnp.zeros((B, weights1.shape[0], H, Wf), dtype=jnp.complex64)
    out_ft = out_ft.at[:, :, :m, :m].set(o1)
    out_ft = out_ft.at[:, :, H - m:, :m].set(o2)
    return jnp.fft.irfft2(out_ft, s=(H, W), norm="ortho").astype(jnp.float32)


if __name__ == "__main__":
    key = jax.random.PRNGKey(0)
    kx, k1, k2 = jax.random.split(key, 3)

    # Small shapes: batch=2, in_channels=out_channels=4, spatial 16x16, n_modes=8
    # (the module's einsum requires in_channels == out_channels)
    B, C_in, C_out, H, W, n_modes = 2, 4, 4, 16, 16, 8

    x = jax.random.normal(kx, (B, C_in, H, W), dtype=jnp.float32)
    scale = 1.0 / (C_in * C_out)
    weights1 = scale * jax.random.uniform(k1, (C_in, C_out, n_modes, n_modes, 2),
                                          dtype=jnp.float32)
    weights2 = scale * jax.random.uniform(k2, (C_in, C_out, n_modes, n_modes, 2),
                                          dtype=jnp.float32)

    # One-time parameter preprocessing (hoisted out of the forward pass).
    w_packed = prepare_spectral_weights(weights1, weights2)

    out = jax.block_until_ready(spectral_conv2d_forward(x, w_packed, n_modes))
    assert out.shape == (B, C_in, H, W), out.shape

    ref = jax.block_until_ready(_reference_forward(x, weights1, weights2, n_modes))
    err = float(jnp.max(jnp.abs(out - ref)))
    assert jnp.allclose(out, ref, rtol=1e-3, atol=1e-4), err

    print("KERNEL_OK")
</pallas_src>

<mosaic_0001>
module attributes {stable_mosaic.version = 11 : i64} {
  func.func @kernel(%arg0: i32, %arg1: i32, %arg2: memref<2x2x4x128xf32, #tpu.memory_space<vmem>>, %arg3: memref<4x2x4x128xf32, #tpu.memory_space<vmem>>, %arg4: memref<2x2x4x128xf32, #tpu.memory_space<vmem>>) attributes {dimension_semantics = [#tpu.dimension_semantics<parallel>, #tpu.dimension_semantics<parallel>], iteration_bounds = array<i64: 1, 1>, scalar_prefetch = 0 : i64, scratch_operands = 0 : i64, tpu.core_type = #tpu.core_type<tc>, window_params = [{transform_indices = @transform_0, window_bounds = array<i64: 2, 2, 4, 128>}, {transform_indices = @transform_1, window_bounds = array<i64: 4, 2, 4, 128>}, {transform_indices = @transform_2, window_bounds = array<i64: 2, 2, 4, 128>}]} {
    %cst = arith.constant 0.000000e+00 : f32
    %0 = vector.broadcast %cst : f32 to vector<4x128xf32>
    %cst_0 = arith.constant 0.000000e+00 : f32
    %1 = vector.broadcast %cst_0 : f32 to vector<4x128xf32>
    %c0 = arith.constant 0 : index
    %c0_1 = arith.constant 0 : index
    %c0_2 = arith.constant 0 : index
    %c0_3 = arith.constant 0 : index
    %2 = vector.load %arg2[%c0, %c0_1, %c0_2, %c0_3] : memref<2x2x4x128xf32, #tpu.memory_space<vmem>>, vector<1x1x1x128xf32>
    %3 = vector.shape_cast %2 : vector<1x1x1x128xf32> to vector<1x128xf32>
    %c0_4 = arith.constant 0 : index
    %c1 = arith.constant 1 : index
    %c0_5 = arith.constant 0 : index
    %c0_6 = arith.constant 0 : index
    %4 = vector.load %arg2[%c0_4, %c1, %c0_5, %c0_6] : memref<2x2x4x128xf32, #tpu.memory_space<vmem>>, vector<1x1x1x128xf32>
    %5 = vector.shape_cast %4 : vector<1x1x1x128xf32> to vector<1x128xf32>
    %c0_7 = arith.constant 0 : index
    %c0_8 = arith.constant 0 : index
    %c0_9 = arith.constant 0 : index
    %c0_10 = arith.constant 0 : index
    %6 = vector.load %arg3[%c0_7, %c0_8, %c0_9, %c0_10] : memref<4x2x4x128xf32, #tpu.memory_space<vmem>>, vector<1x2x4x128xf32>
    %7 = vector.shape_cast %6 : vector<1x2x4x128xf32> to vector<2x4x128xf32>
    %8 = vector.extract_strided_slice %7 {offsets = [0, 0, 0], sizes = [1, 4, 128], strides = [1, 1, 1]} : vector<2x4x128xf32> to vector<1x4x128xf32>
    %9 = vector.shape_cast %8 : vector<1x4x128xf32> to vector<4x128xf32>
    %10 = vector.extract_strided_slice %7 {offsets = [1, 0, 0], sizes = [1, 4, 128], strides = [1, 1, 1]} : vector<2x4x128xf32> to vector<1x4x128xf32>
    %11 = vector.shape_cast %10 : vector<1x4x128xf32> to vector<4x128xf32>
    %12 = vector.broadcast %3 : vector<1x128xf32> to vector<4x128xf32>
    %13 = arith.mulf %12, %9 : vector<4x128xf32>
    %14 = vector.broadcast %5 : vector<1x128xf32> to vector<4x128xf32>
    %15 = arith.mulf %14, %11 : vector<4x128xf32>
    %16 = arith.subf %13, %15 : vector<4x128xf32>
    %17 = arith.addf %0, %16 : vector<4x128xf32>
    %18 = vector.broadcast %5 : vector<1x128xf32> to vector<4x128xf32>
    %19 = arith.mulf %18, %9 : vector<4x128xf32>
    %20 = vector.broadcast %3 : vector<1x128xf32> to vector<4x128xf32>
    %21 = arith.mulf %20, %11 : vector<4x128xf32>
    %22 = arith.addf %19, %21 : vector<4x128xf32>
    %23 = arith.addf %1, %22 : vector<4x128xf32>
    %c0_11 = arith.constant 0 : index
    %c0_12 = arith.constant 0 : index
    %c1_13 = arith.constant 1 : index
    %c0_14 = arith.constant 0 : index
    %24 = vector.load %arg2[%c0_11, %c0_12, %c1_13, %c0_14] : memref<2x2x4x128xf32, #tpu.memory_space<vmem>>, vector<1x1x1x128xf32>
    %25 = vector.shape_cast %24 : vector<1x1x1x128xf32> to vector<1x128xf32>
    %c0_15 = arith.constant 0 : index
    %c1_16 = arith.constant 1 : index
    %c1_17 = arith.constant 1 : index
    %c0_18 = arith.constant 0 : index
    %26 = vector.load %arg2[%c0_15, %c1_16, %c1_17, %c0_18] : memref<2x2x4x128xf32, #tpu.memory_space<vmem>>, vector<1x1x1x128xf32>
    %27 = vector.shape_cast %26 : vector<1x1x1x128xf32> to vector<1x128xf32>
    %c1_19 = arith.constant 1 : index
    %c0_20 = arith.constant 0 : index
    %c0_21 = arith.constant 0 : index
    %c0_22 = arith.constant 0 : index
    %28 = vector.load %arg3[%c1_19, %c0_20, %c0_21, %c0_22] : memref<4x2x4x128xf32, #tpu.memory_space<vmem>>, vector<1x2x4x128xf32>
    %29 = vector.shape_cast %28 : vector<1x2x4x128xf32> to vector<2x4x128xf32>
    %30 = vector.extract_strided_slice %29 {offsets = [0, 0, 0], sizes = [1, 4, 128], strides = [1, 1, 1]} : vector<2x4x128xf32> to vector<1x4x128xf32>
    %31 = vector.shape_cast %30 : vector<1x4x128xf32> to vector<4x128xf32>
    %32 = vector.extract_strided_slice %29 {offsets = [1, 0, 0], sizes = [1, 4, 128], strides = [1, 1, 1]} : vector<2x4x128xf32> to vector<1x4x128xf32>
    %33 = vector.shape_cast %32 : vector<1x4x128xf32> to vector<4x128xf32>
    %34 = vector.broadcast %25 : vector<1x128xf32> to vector<4x128xf32>
    %35 = arith.mulf %34, %31 : vector<4x128xf32>
    %36 = vector.broadcast %27 : vector<1x128xf32> to vector<4x128xf32>
    %37 = arith.mulf %36, %33 : vector<4x128xf32>
    %38 = arith.subf %35, %37 : vector<4x128xf32>
    %39 = arith.addf %17, %38 : vector<4x128xf32>
    %40 = vector.broadcast %27 : vector<1x128xf32> to vector<4x128xf32>
    %41 = arith.mulf %40, %31 : vector<4x128xf32>
    %42 = vector.broadcast %25 : vector<1x128xf32> to vector<4x128xf32>
    %43 = arith.mulf %42, %33 : vector<4x128xf32>
    %44 = arith.addf %41, %43 : vector<4x128xf32>
    %45 = arith.addf %23, %44 : vector<4x128xf32>
    %c0_23 = arith.constant 0 : index
    %c0_24 = arith.constant 0 : index
    %c2 = arith.constant 2 : index
    %c0_25 = arith.constant 0 : index
    %46 = vector.load %arg2[%c0_23, %c0_24, %c2, %c0_25] : memref<2x2x4x128xf32, #tpu.memory_space<vmem>>, vector<1x1x1x128xf32>
    %47 = vector.shape_cast %46 : vector<1x1x1x128xf32> to vector<1x128xf32>
    %c0_26 = arith.constant 0 : index
    %c1_27 = arith.constant 1 : index
    %c2_28 = arith.constant 2 : index
    %c0_29 = arith.constant 0 : index
    %48 = vector.load %arg2[%c0_26, %c1_27, %c2_28, %c0_29] : memref<2x2x4x128xf32, #tpu.memory_space<vmem>>, vector<1x1x1x128xf32>
    %49 = vector.shape_cast %48 : vector<1x1x1x128xf32> to vector<1x128xf32>
    %c2_30 = arith.constant 2 : index
    %c0_31 = arith.constant 0 : index
    %c0_32 = arith.constant 0 : index
    %c0_33 = arith.constant 0 : index
    %50 = vector.load %arg3[%c2_30, %c0_31, %c0_32, %c0_33] : memref<4x2x4x128xf32, #tpu.memory_space<vmem>>, vector<1x2x4x128xf32>
    %51 = vector.shape_cast %50 : vector<1x2x4x128xf32> to vector<2x4x128xf32>
    %52 = vector.extract_strided_slice %51 {offsets = [0, 0, 0], sizes = [1, 4, 128], strides = [1, 1, 1]} : vector<2x4x128xf32> to vector<1x4x128xf32>
    %53 = vector.shape_cast %52 : vector<1x4x128xf32> to vector<4x128xf32>
    %54 = vector.extract_strided_slice %51 {offsets = [1, 0, 0], sizes = [1, 4, 128], strides = [1, 1, 1]} : vector<2x4x128xf32> to vector<1x4x128xf32>
    %55 = vector.shape_cast %54 : vector<1x4x128xf32> to vector<4x128xf32>
    %56 = vector.broadcast %47 : vector<1x128xf32> to vector<4x128xf32>
    %57 = arith.mulf %56, %53 : vector<4x128xf32>
    %58 = vector.broadcast %49 : vector<1x128xf32> to vector<4x128xf32>
    %59 = arith.mulf %58, %55 : vector<4x128xf32>
    %60 = arith.subf %57, %59 : vector<4x128xf32>
    %61 = arith.addf %39, %60 : vector<4x128xf32>
    %62 = vector.broadcast %49 : vector<1x128xf32> to vector<4x128xf32>
    %63 = arith.mulf %62, %53 : vector<4x128xf32>
    %64 = vector.broadcast %47 : vector<1x128xf32> to vector<4x128xf32>
    %65 = arith.mulf %64, %55 : vector<4x128xf32>
    %66 = arith.addf %63, %65 : vector<4x128xf32>
    %67 = arith.addf %45, %66 : vector<4x128xf32>
    %c0_34 = arith.constant 0 : index
    %c0_35 = arith.constant 0 : index
    %c3 = arith.constant 3 : index
    %c0_36 = arith.constant 0 : index
    %68 = vector.load %arg2[%c0_34, %c0_35, %c3, %c0_36] : memref<2x2x4x128xf32, #tpu.memory_space<vmem>>, vector<1x1x1x128xf32>
    %69 = vector.shape_cast %68 : vector<1x1x1x128xf32> to vector<1x128xf32>
    %c0_37 = arith.constant 0 : index
    %c1_38 = arith.constant 1 : index
    %c3_39 = arith.constant 3 : index
    %c0_40 = arith.constant 0 : index
    %70 = vector.load %arg2[%c0_37, %c1_38, %c3_39, %c0_40] : memref<2x2x4x128xf32, #tpu.memory_space<vmem>>, vector<1x1x1x128xf32>
    %71 = vector.shape_cast %70 : vector<1x1x1x128xf32> to vector<1x128xf32>
    %c3_41 = arith.constant 3 : index
    %c0_42 = arith.constant 0 : index
    %c0_43 = arith.constant 0 : index
    %c0_44 = arith.constant 0 : index
    %72 = vector.load %arg3[%c3_41, %c0_42, %c0_43, %c0_44] : memref<4x2x4x128xf32, #tpu.memory_space<vmem>>, vector<1x2x4x128xf32>
    %73 = vector.shape_cast %72 : vector<1x2x4x128xf32> to vector<2x4x128xf32>
    %74 = vector.extract_strided_slice %73 {offsets = [0, 0, 0], sizes = [1, 4, 128], strides = [1, 1, 1]} : vector<2x4x128xf32> to vector<1x4x128xf32>
    %75 = vector.shape_cast %74 : vector<1x4x128xf32> to vector<4x128xf32>
    %76 = vector.extract_strided_slice %73 {offsets = [1, 0, 0], sizes = [1, 4, 128], strides = [1, 1, 1]} : vector<2x4x128xf32> to vector<1x4x128xf32>
    %77 = vector.shape_cast %76 : vector<1x4x128xf32> to vector<4x128xf32>
    %78 = vector.broadcast %69 : vector<1x128xf32> to vector<4x128xf32>
    %79 = arith.mulf %78, %75 : vector<4x128xf32>
    %80 = vector.broadcast %71 : vector<1x128xf32> to vector<4x128xf32>
    %81 = arith.mulf %80, %77 : vector<4x128xf32>
    %82 = arith.subf %79, %81 : vector<4x128xf32>
    %83 = arith.addf %61, %82 : vector<4x128xf32>
    %84 = vector.broadcast %71 : vector<1x128xf32> to vector<4x128xf32>
    %85 = arith.mulf %84, %75 : vector<4x128xf32>
    %86 = vector.broadcast %69 : vector<1x128xf32> to vector<4x128xf32>
    %87 = arith.mulf %86, %77 : vector<4x128xf32>
    %88 = arith.addf %85, %87 : vector<4x128xf32>
    %89 = arith.addf %67, %88 : vector<4x128xf32>
    %c0_45 = arith.constant 0 : index
    %c0_46 = arith.constant 0 : index
    %c0_47 = arith.constant 0 : index
    %c0_48 = arith.constant 0 : index
    %90 = vector.load %arg4[%c0_45, %c0_46, %c0_47, %c0_48] : memref<2x2x4x128xf32, #tpu.memory_space<vmem>>, vector<1x1x4x128xf32>
    %91 = vector.shape_cast %90 : vector<1x1x4x128xf32> to vector<4x128xf32>
    %92 = vector.shape_cast %83 : vector<4x128xf32> to vector<1x1x4x128xf32>
    tpu.vector_store %arg4[%c0_45, %c0_46, %c0_47, %c0_48], %92 {strides = array<i32>} : memref<2x2x4x128xf32, #tpu.memory_space<vmem>>, vector<1x1x4x128xf32>,
    %c0_49 = arith.constant 0 : index
    %c1_50 = arith.constant 1 : index
    %c0_51 = arith.constant 0 : index
    %c0_52 = arith.constant 0 : index
    %93 = vector.load %arg4[%c0_49, %c1_50, %c0_51, %c0_52] : memref<2x2x4x128xf32, #tpu.memory_space<vmem>>, vector<1x1x4x128xf32>
    %94 = vector.shape_cast %93 : vector<1x1x4x128xf32> to vector<4x128xf32>
    %95 = vector.shape_cast %89 : vector<4x128xf32> to vector<1x1x4x128xf32>
    tpu.vector_store %arg4[%c0_49, %c1_50, %c0_51, %c0_52], %95 {strides = array<i32>} : memref<2x2x4x128xf32, #tpu.memory_space<vmem>>, vector<1x1x4x128xf32>,
    %cst_53 = arith.constant 0.000000e+00 : f32
    %96 = vector.broadcast %cst_53 : f32 to vector<4x128xf32>
    %cst_54 = arith.constant 0.000000e+00 : f32
    %97 = vector.broadcast %cst_54 : f32 to vector<4x128xf32>
    %c1_55 = arith.constant 1 : index
    %c0_56 = arith.constant 0 : index
    %c0_57 = arith.constant 0 : index
    %c0_58 = arith.constant 0 : index
    %98 = vector.load %arg2[%c1_55, %c0_56, %c0_57, %c0_58] : memref<2x2x4x128xf32, #tpu.memory_space<vmem>>, vector<1x1x1x128xf32>
    %99 = vector.shape_cast %98 : vector<1x1x1x128xf32> to vector<1x128xf32>
    %c1_59 = arith.constant 1 : index
    %c1_60 = arith.constant 1 : index
    %c0_61 = arith.constant 0 : index
    %c0_62 = arith.constant 0 : index
    %100 = vector.load %arg2[%c1_59, %c1_60, %c0_61, %c0_62] : memref<2x2x4x128xf32, #tpu.memory_space<vmem>>, vector<1x1x1x128xf32>
    %101 = vector.shape_cast %100 : vector<1x1x1x128xf32> to vector<1x128xf32>
    %c0_63 = arith.constant 0 : index
    %c0_64 = arith.constant 0 : index
    %c0_65 = arith.constant 0 : index
    %c0_66 = arith.constant 0 : index
    %102 = vector.load %arg3[%c0_63, %c0_64, %c0_65, %c0_66] : memref<4x2x4x128xf32, #tpu.memory_space<vmem>>, vector<1x2x4x128xf32>
    %103 = vector.shape_cast %102 : vector<1x2x4x128xf32> to vector<2x4x128xf32>
    %104 = vector.extract_strided_slice %103 {offsets = [0, 0, 0], sizes = [1, 4, 128], strides = [1, 1, 1]} : vector<2x4x128xf32> to vector<1x4x128xf32>
    %105 = vector.shape_cast %104 : vector<1x4x128xf32> to vector<4x128xf32>
    %106 = vector.extract_strided_slice %103 {offsets = [1, 0, 0], sizes = [1, 4, 128], strides = [1, 1, 1]} : vector<2x4x128xf32> to vector<1x4x128xf32>
    %107 = vector.shape_cast %106 : vector<1x4x128xf32> to vector<4x128xf32>
    %108 = vector.broadcast %99 : vector<1x128xf32> to vector<4x128xf32>
    %109 = arith.mulf %108, %105 : vector<4x128xf32>
    %110 = vector.broadcast %101 : vector<1x128xf32> to vector<4x128xf32>
    %111 = arith.mulf %110, %107 : vector<4x128xf32>
    %112 = arith.subf %109, %111 : vector<4x128xf32>
    %113 = arith.addf %96, %112 : vector<4x128xf32>
    %114 = vector.broadcast %101 : vector<1x128xf32> to vector<4x128xf32>
    %115 = arith.mulf %114, %105 : vector<4x128xf32>
    %116 = vector.broadcast %99 : vector<1x128xf32> to vector<4x128xf32>
    %117 = arith.mulf %116, %107 : vector<4x128xf32>
    %118 = arith.addf %115, %117 : vector<4x128xf32>
    %119 = arith.addf %97, %118 : vector<4x128xf32>
    %c1_67 = arith.constant 1 : index
    %c0_68 = arith.constant 0 : index
    %c1_69 = arith.constant 1 : index
    %c0_70 = arith.constant 0 : index
    %120 = vector.load %arg2[%c1_67, %c0_68, %c1_69, %c0_70] : memref<2x2x4x128xf32, #tpu.memory_space<vmem>>, vector<1x1x1x128xf32>
    %121 = vector.shape_cast %120 : vector<1x1x1x128xf32> to vector<1x128xf32>
    %c1_71 = arith.constant 1 : index
    %c1_72 = arith.constant 1 : index
    %c1_73 = arith.constant 1 : index
    %c0_74 = arith.constant 0 : index
    %122 = vector.load %arg2[%c1_71, %c1_72, %c1_73, %c0_74] : memref<2x2x4x128xf32, #tpu.memory_space<vmem>>, vector<1x1x1x128xf32>
    %123 = vector.shape_cast %122 : vector<1x1x1x128xf32> to vector<1x128xf32>
    %c1_75 = arith.constant 1 : index
    %c0_76 = arith.constant 0 : index
    %c0_77 = arith.constant 0 : index
    %c0_78 = arith.constant 0 : index
    %124 = vector.load %arg3[%c1_75, %c0_76, %c0_77, %c0_78] : memref<4x2x4x128xf32, #tpu.memory_space<vmem>>, vector<1x2x4x128xf32>
    %125 = vector.shape_cast %124 : vector<1x2x4x128xf32> to vector<2x4x128xf32>
    %126 = vector.extract_strided_slice %125 {offsets = [0, 0, 0], sizes = [1, 4, 128], strides = [1, 1, 1]} : vector<2x4x128xf32> to vector<1x4x128xf32>
    %127 = vector.shape_cast %126 : vector<1x4x128xf32> to vector<4x128xf32>
    %128 = vector.extract_strided_slice %125 {offsets = [1, 0, 0], sizes = [1, 4, 128], strides = [1, 1, 1]} : vector<2x4x128xf32> to vector<1x4x128xf32>
    %129 = vector.shape_cast %128 : vector<1x4x128xf32> to vector<4x128xf32>
    %130 = vector.broadcast %121 : vector<1x128xf32> to vector<4x128xf32>
    %131 = arith.mulf %130, %127 : vector<4x128xf32>
    %132 = vector.broadcast %123 : vector<1x128xf32> to vector<4x128xf32>
    %133 = arith.mulf %132, %129 : vector<4x128xf32>
    %134 = arith.subf %131, %133 : vector<4x128xf32>
    %135 = arith.addf %113, %134 : vector<4x128xf32>
    %136 = vector.broadcast %123 : vector<1x128xf32> to vector<4x128xf32>
    %137 = arith.mulf %136, %127 : vector<4x128xf32>
    %138 = vector.broadcast %121 : vector<1x128xf32> to vector<4x128xf32>
    %139 = arith.mulf %138, %129 : vector<4x128xf32>
    %140 = arith.addf %137, %139 : vector<4x128xf32>
    %141 = arith.addf %119, %140 : vector<4x128xf32>
    %c1_79 = arith.constant 1 : index
    %c0_80 = arith.constant 0 : index
    %c2_81 = arith.constant 2 : index
    %c0_82 = arith.constant 0 : index
    %142 = vector.load %arg2[%c1_79, %c0_80, %c2_81, %c0_82] : memref<2x2x4x128xf32, #tpu.memory_space<vmem>>, vector<1x1x1x128xf32>
    %143 = vector.shape_cast %142 : vector<1x1x1x128xf32> to vector<1x128xf32>
    %c1_83 = arith.constant 1 : index
    %c1_84 = arith.constant 1 : index
    %c2_85 = arith.constant 2 : index
    %c0_86 = arith.constant 0 : index
    %144 = vector.load %arg2[%c1_83, %c1_84, %c2_85, %c0_86] : memref<2x2x4x128xf32, #tpu.memory_space<vmem>>, vector<1x1x1x128xf32>
    %145 = vector.shape_cast %144 : vector<1x1x1x128xf32> to vector<1x128xf32>
    %c2_87 = arith.constant 2 : index
    %c0_88 = arith.constant 0 : index
    %c0_89 = arith.constant 0 : index
    %c0_90 = arith.constant 0 : index
    %146 = vector.load %arg3[%c2_87, %c0_88, %c0_89, %c0_90] : memref<4x2x4x128xf32, #tpu.memory_space<vmem>>, vector<1x2x4x128xf32>
    %147 = vector.shape_cast %146 : vector<1x2x4x128xf32> to vector<2x4x128xf32>
    %148 = vector.extract_strided_slice %147 {offsets = [0, 0, 0], sizes = [1, 4, 128], strides = [1, 1, 1]} : vector<2x4x128xf32> to vector<1x4x128xf32>
    %149 = vector.shape_cast %148 : vector<1x4x128xf32> to vector<4x128xf32>
    %150 = vector.extract_strided_slice %147 {offsets = [1, 0, 0], sizes = [1, 4, 128], strides = [1, 1, 1]} : vector<2x4x128xf32> to vector<1x4x128xf32>
    %151 = vector.shape_cast %150 : vector<1x4x128xf32> to vector<4x128xf32>
    %152 = vector.broadcast %143 : vector<1x128xf32> to vector<4x128xf32>
    %153 = arith.mulf %152, %149 : vector<4x128xf32>
    %154 = vector.broadcast %145 : vector<1x128xf32> to vector<4x128xf32>
    %155 = arith.mulf %154, %151 : vector<4x128xf32>
    %156 = arith.subf %153, %155 : vector<4x128xf32>
    %157 = arith.addf %135, %156 : vector<4x128xf32>
    %158 = vector.broadcast %145 : vector<1x128xf32> to vector<4x128xf32>
    %159 = arith.mulf %158, %149 : vector<4x128xf32>
    %160 = vector.broadcast %143 : vector<1x128xf32> to vector<4x128xf32>
    %161 = arith.mulf %160, %151 : vector<4x128xf32>
    %162 = arith.addf %159, %161 : vector<4x128xf32>
    %163 = arith.addf %141, %162 : vector<4x128xf32>
    %c1_91 = arith.constant 1 : index
    %c0_92 = arith.constant 0 : index
    %c3_93 = arith.constant 3 : index
    %c0_94 = arith.constant 0 : index
    %164 = vector.load %arg2[%c1_91, %c0_92, %c3_93, %c0_94] : memref<2x2x4x128xf32, #tpu.memory_space<vmem>>, vector<1x1x1x128xf32>
    %165 = vector.shape_cast %164 : vector<1x1x1x128xf32> to vector<1x128xf32>
    %c1_95 = arith.constant 1 : index
    %c1_96 = arith.constant 1 : index
    %c3_97 = arith.constant 3 : index
    %c0_98 = arith.constant 0 : index
    %166 = vector.load %arg2[%c1_95, %c1_96, %c3_97, %c0_98] : memref<2x2x4x128xf32, #tpu.memory_space<vmem>>, vector<1x1x1x128xf32>
    %167 = vector.shape_cast %166 : vector<1x1x1x128xf32> to vector<1x128xf32>
    %c3_99 = arith.constant 3 : index
    %c0_100 = arith.constant 0 : index
    %c0_101 = arith.constant 0 : index
    %c0_102 = arith.constant 0 : index
    %168 = vector.load %arg3[%c3_99, %c0_100, %c0_101, %c0_102] : memref<4x2x4x128xf32, #tpu.memory_space<vmem>>, vector<1x2x4x128xf32>
    %169 = vector.shape_cast %168 : vector<1x2x4x128xf32> to vector<2x4x128xf32>
    %170 = vector.extract_strided_slice %169 {offsets = [0, 0, 0], sizes = [1, 4, 128], strides = [1, 1, 1]} : vector<2x4x128xf32> to vector<1x4x128xf32>
    %171 = vector.shape_cast %170 : vector<1x4x128xf32> to vector<4x128xf32>
    %172 = vector.extract_strided_slice %169 {offsets = [1, 0, 0], sizes = [1, 4, 128], strides = [1, 1, 1]} : vector<2x4x128xf32> to vector<1x4x128xf32>
    %173 = vector.shape_cast %172 : vector<1x4x128xf32> to vector<4x128xf32>
    %174 = vector.broadcast %165 : vector<1x128xf32> to vector<4x128xf32>
    %175 = arith.mulf %174, %171 : vector<4x128xf32>
    %176 = vector.broadcast %167 : vector<1x128xf32> to vector<4x128xf32>
    %177 = arith.mulf %176, %173 : vector<4x128xf32>
    %178 = arith.subf %175, %177 : vector<4x128xf32>
    %179 = arith.addf %157, %178 : vector<4x128xf32>
    %180 = vector.broadcast %167 : vector<1x128xf32> to vector<4x128xf32>
    %181 = arith.mulf %180, %171 : vector<4x128xf32>
    %182 = vector.broadcast %165 : vector<1x128xf32> to vector<4x128xf32>
    %183 = arith.mulf %182, %173 : vector<4x128xf32>
    %184 = arith.addf %181, %183 : vector<4x128xf32>
    %185 = arith.addf %163, %184 : vector<4x128xf32>
    %c1_103 = arith.constant 1 : index
    %c0_104 = arith.constant 0 : index
    %c0_105 = arith.constant 0 : index
    %c0_106 = arith.constant 0 : index
    %186 = vector.load %arg4[%c1_103, %c0_104, %c0_105, %c0_106] : memref<2x2x4x128xf32, #tpu.memory_space<vmem>>, vector<1x1x4x128xf32>
    %187 = vector.shape_cast %186 : vector<1x1x4x128xf32> to vector<4x128xf32>
    %188 = vector.shape_cast %179 : vector<4x128xf32> to vector<1x1x4x128xf32>
    tpu.vector_store %arg4[%c1_103, %c0_104, %c0_105, %c0_106], %188 {strides = array<i32>} : memref<2x2x4x128xf32, #tpu.memory_space<vmem>>, vector<1x1x4x128xf32>,
    %c1_107 = arith.constant 1 : index
    %c1_108 = arith.constant 1 : index
    %c0_109 = arith.constant 0 : index
    %c0_110 = arith.constant 0 : index
    %189 = vector.load %arg4[%c1_107, %c1_108, %c0_109, %c0_110] : memref<2x2x4x128xf32, #tpu.memory_space<vmem>>, vector<1x1x4x128xf32>
    %190 = vector.shape_cast %189 : vector<1x1x4x128xf32> to vector<4x128xf32>
    %191 = vector.shape_cast %185 : vector<4x128xf32> to vector<1x1x4x128xf32>
    tpu.vector_store %arg4[%c1_107, %c1_108, %c0_109, %c0_110], %191 {strides = array<i32>} : memref<2x2x4x128xf32, #tpu.memory_space<vmem>>, vector<1x1x4x128xf32>,
    return
  }
  func.func @transform_0(%arg0: i32, %arg1: i32) -> (i32, i32, i32, i32) {
    %c0_i32 = arith.constant 0 : i32
    %c0_i32_0 = arith.constant 0 : i32
    %c0_i32_1 = arith.constant 0 : i32
    return %arg1, %c0_i32, %c0_i32_0, %arg0 : i32, i32, i32, i32
  }
  func.func @transform_1(%arg0: i32, %arg1: i32) -> (i32, i32, i32, i32) {
    %c0_i32 = arith.constant 0 : i32
    %c0_i32_0 = arith.constant 0 : i32
    %c0_i32_1 = arith.constant 0 : i32
    %c0_i32_2 = arith.constant 0 : i32
    return %c0_i32, %c0_i32_0, %c0_i32_1, %arg0 : i32, i32, i32, i32
  }
  func.func @transform_2(%arg0: i32, %arg1: i32) -> (i32, i32, i32, i32) {
    %c0_i32 = arith.constant 0 : i32
    %c0_i32_0 = arith.constant 0 : i32
    %c0_i32_1 = arith.constant 0 : i32
    return %arg1, %c0_i32, %c0_i32_0, %arg0 : i32, i32, i32, i32
  }
}

</mosaic_0001>

<llo_original>
// kernel: tpu_custom_call.1
$region0: #{tpu_custom_call.1}
  #allocation0 [shape = 'u32[]', space=smem, size = 0x4, offset = 0x4, fixed_abs, tag = 'smem constant byte address 0x4 - core index']
  #allocation1 [shape = 'u32[144,128]{1,0:T(1,128)}', space=vmem, size = 0x12000, scoped, tag = 'internal scratch']
  %s0 = inlined_call_operand.hbm [shape: f32[2,2,4,128], index: 0, kind: input, shape index: {}]
  %s1 = inlined_call_operand.hbm [shape: f32[4,2,4,128], index: 1, kind: input, shape index: {}]
  %s2 = inlined_call_operand.hbm [shape: f32[2,2,4,128], index: 2, kind: output, shape index: {}]
  %s3 = sld [smem:[#allocation0]]
  $region26: #{tpu_custom_call.1} parent=0
    _
  %s5 = ssub.s32 1, %s3
  %s6 = scalar_select 0, %s5, %s3
  $region1: #{tpu_custom_call.1} parent=0
    #allocation2 [shape = 'u8[8192]{0}', space=vmem, size = 0x2000, scoped, tag = 'input window, operand 0, single buffered']
    #allocation3 [shape = 's32[1]{0}', space=sflag, size = 0x4, scoped, tag = 'scoped memory for tpu_custom_call.1']
    #allocation4 [shape = 's32[1]{0}', space=sflag, size = 0x4, scoped, tag = 'scoped memory for tpu_custom_call.1']
    #allocation5 [shape = 'u8[16384]{0}', space=vmem, size = 0x4000, scoped, tag = 'input window, operand 1, single buffered']
    #allocation6 [shape = 's32[1]{0}', space=sflag, size = 0x4, scoped, tag = 'scoped memory for tpu_custom_call.1']
    #allocation7 [shape = 'u8[8192]{0}', space=vmem, size = 0x2000, scoped, tag = 'output window, operand 0, single buffered']
    %7 = vsyncpa [#allocation3], 0
    %8 = vsyncpa [#allocation6], 0
    %9 = vsyncpa [#allocation4], 0
    // Predicated region
    $region2: #{tpu_custom_call.1} parent=1 // pred_check
      _
    $region3: #{tpu_custom_call.1} parent=1 // pred_check_branch
      %11 = sbr.rel (0) target = $region5
    $region4: #{tpu_custom_call.1} parent=1 // pred_region
      %s13 = ssub.s32 256, 256
      %14 = vsyncadd [#allocation3], %s13
      %s15 = sshll.u32 [#allocation2], 4
      %s16 = int_to_ptr.vmem [resolvable:$true] %s15
      %21 = dma.hbm_to_vmem [thread:$0]  %s0, 256, %s16, [#allocation3], 64, 64, 4
    $region5: #{tpu_custom_call.1} parent=1 // pred_fallthru
      _
    // Predicated region
    $region6: #{tpu_custom_call.1} parent=1 // pred_check
      _
    $region7: #{tpu_custom_call.1} parent=1 // pred_check_branch
      %23 = sbr.rel (0) target = $region9
    $region8: #{tpu_custom_call.1} parent=1 // pred_region
      %s25 = ssub.s32 512, 512
      %26 = vsyncadd [#allocation6], %s25
      %s27 = sshll.u32 [#allocation5], 4
      %s28 = int_to_ptr.vmem [resolvable:$true] %s27
      %33 = dma.hbm_to_vmem [thread:$0]  %s1, 512, %s28, [#allocation6], 64, 64, 4
    $region9: #{tpu_custom_call.1} parent=1 // pred_fallthru
      _
    // Predicated region
    $region10: #{tpu_custom_call.1} parent=1 // pred_check
      _
    $region11: #{tpu_custom_call.1} parent=1 // pred_check_branch
      %35 = sbr.rel (0) target = $region13
    $region12: #{tpu_custom_call.1} parent=1 // pred_region
      %36 = dma.done [#allocation3], 256
    $region13: #{tpu_custom_call.1} parent=1 // pred_fallthru
      _
    // Predicated region
    $region14: #{tpu_custom_call.1} parent=1 // pred_check
      _
    $region15: #{tpu_custom_call.1} parent=1 // pred_check_branch
      %38 = sbr.rel (0) target = $region17
    $region16: #{tpu_custom_call.1} parent=1 // pred_region
      %39 = dma.done [#allocation6], 512
    $region17: #{tpu_custom_call.1} parent=1 // pred_fallthru
      _
    %v40 = vld [vmem:[#allocation2] sm:$0x1]
    %s41 = scalar_lea.vmem [#allocation2], 4
    %v42 = vld [vmem:[%s41] sm:$0x1]
    %v43 = vld [vmem:[#allocation5] sm:$0xf]
    %v44 = vld [vmem:[#allocation5 + $0x4] sm:$0xf]
    %v45 = vlaneseq
    %v46 = vshrl.u32 %v45, 7
    %v47 = vsub.s32 0, %v46
    %v48 = vrot.slane %v40, %v47
    %v49 = vmul.f32 %v48, %v43
    %v50 = vlaneseq
    %v51 = vshrl.u32 %v50, 7
    %v52 = vsub.s32 0, %v51
    %v53 = vrot.slane %v42, %v52
    %v54 = vmul.f32 %v53, %v44
    %v55 = vsub.f32 %v49, %v54
    %v56 = vadd.f32 %v55, 0.0
    %v57 = vmul.f32 %v53, %v43
    %v58 = vmul.f32 %v48, %v44
    %v59 = vadd.f32 %v57, %v58
    %v60 = vadd.f32 %v59, 0.0
    %v61 = vld [vmem:[#allocation2 + $0x1] sm:$0x1]
    %v62 = vld [vmem:[%s41 + $0x1] sm:$0x1]
    %s63 = scalar_lea.vmem [#allocation5], 8
    %v64 = vld [vmem:[%s63] sm:$0xf]
    %v65 = vld [vmem:[%s63 + $0x4] sm:$0xf]
    %v66 = vlaneseq
    %v67 = vshrl.u32 %v66, 7
    %v68 = vsub.s32 0, %v67
    %v69 = vrot.slane %v61, %v68
    %v70 = vmul.f32 %v69, %v64
    %v71 = vlaneseq
    %v72 = vshrl.u32 %v71, 7
    %v73 = vsub.s32 0, %v72
    %v74 = vrot.slane %v62, %v73
    %v75 = vmul.f32 %v74, %v65
    %v76 = vsub.f32 %v70, %v75
    %v77 = vadd.f32 %v56, %v76
    %v78 = vmul.f32 %v74, %v64
    %v79 = vmul.f32 %v69, %v65
    %v80 = vadd.f32 %v78, %v79
    %v81 = vadd.f32 %v60, %v80
    %v82 = vld [vmem:[#allocation2 + $0x2] sm:$0x1]
    %v83 = vld [vmem:[%s41 + $0x2] sm:$0x1]
    %s84 = scalar_lea.vmem [#allocation5], 16
    %v85 = vld [vmem:[%s84] sm:$0xf]
    %v86 = vld [vmem:[%s84 + $0x4] sm:$0xf]
    %v87 = vlaneseq
    %v88 = vshrl.u32 %v87, 7
    %v89 = vsub.s32 0, %v88
    %v90 = vrot.slane %v82, %v89
    %v91 = vmul.f32 %v90, %v85
    %v92 = vlaneseq
    %v93 = vshrl.u32 %v92, 7
    %v94 = vsub.s32 0, %v93
    %v95 = vrot.slane %v83, %v94
    %v96 = vmul.f32 %v95, %v86
    %v97 = vsub.f32 %v91, %v96
    %v98 = vadd.f32 %v77, %v97
    %v99 = vmul.f32 %v95, %v85
    %v100 = vmul.f32 %v90, %v86
    %v101 = vadd.f32 %v99, %v100
    %v102 = vadd.f32 %v81, %v101
    %v103 = vld [vmem:[#allocation2 + $0x3] sm:$0x1]
    %v104 = vld [vmem:[%s41 + $0x3] sm:$0x1]
    %s105 = scalar_lea.vmem [#allocation5], 24
    %v106 = vld [vmem:[%s105] sm:$0xf]
    %v107 = vld [vmem:[%s105 + $0x4] sm:$0xf]
    %v108 = vlaneseq
    %v109 = vshrl.u32 %v108, 7
    %v110 = vsub.s32 0, %v109
    %v111 = vrot.slane %v103, %v110
    %v112 = vmul.f32 %v111, %v106
    %v113 = vlaneseq
    %v114 = vshrl.u32 %v113, 7
    %v115 = vsub.s32 0, %v114
    %v116 = vrot.slane %v104, %v115
    %v117 = vmul.f32 %v116, %v107
    %v118 = vsub.f32 %v112, %v117
    %v119 = vadd.f32 %v98, %v118
    %v120 = vmul.f32 %v116, %v106
    %v121 = vmul.f32 %v111, %v107
    %v122 = vadd.f32 %v120, %v121
    %v123 = vadd.f32 %v102, %v122
    %124 = vst [vmem:[#allocation7] sm:$0xf] %v119
    %s125 = scalar_lea.vmem [#allocation7], 4
    %126 = vst [vmem:[%s125] sm:$0xf] %v123
    %s127 = scalar_lea.vmem [#allocation2], 8
    %v128 = vld [vmem:[%s127] sm:$0x1]
    %s129 = scalar_lea.vmem [#allocation2], 12
    %v130 = vld [vmem:[%s129] sm:$0x1]
    %v131 = vld [vmem:[#allocation5] sm:$0xf]
    %v132 = vld [vmem:[#allocation5 + $0x4] sm:$0xf]
    %v133 = vlaneseq
    %v134 = vshrl.u32 %v133, 7
    %v135 = vsub.s32 0, %v134
    %v136 = vrot.slane %v128, %v135
    %v137 = vmul.f32 %v136, %v131
    %v138 = vlaneseq
    %v139 = vshrl.u32 %v138, 7
    %v140 = vsub.s32 0, %v139
    %v141 = vrot.slane %v130, %v140
    %v142 = vmul.f32 %v141, %v132
    %v143 = vsub.f32 %v137, %v142
    %v144 = vadd.f32 %v143, 0.0
    %v145 = vmul.f32 %v141, %v131
    %v146 = vmul.f32 %v136, %v132
    %v147 = vadd.f32 %v145, %v146
    %v148 = vadd.f32 %v147, 0.0
    %v149 = vld [vmem:[%s127 + $0x1] sm:$0x1]
    %v150 = vld [vmem:[%s129 + $0x1] sm:$0x1]
    %v151 = vld [vmem:[%s63] sm:$0xf]
    %v152 = vld [vmem:[%s63 + $0x4] sm:$0xf]
    %v153 = vlaneseq
    %v154 = vshrl.u32 %v153, 7
    %v155 = vsub.s32 0, %v154
    %v156 = vrot.slane %v149, %v155
    %v157 = vmul.f32 %v156, %v151
    %v158 = vlaneseq
    %v159 = vshrl.u32 %v158, 7
    %v160 = vsub.s32 0, %v159
    %v161 = vrot.slane %v150, %v160
    %v162 = vmul.f32 %v161, %v152
    %v163 = vsub.f32 %v157, %v162
    %v164 = vadd.f32 %v144, %v163
    %v165 = vmul.f32 %v161, %v151
    %v166 = vmul.f32 %v156, %v152
    %v167 = vadd.f32 %v165, %v166
    %v168 = vadd.f32 %v148, %v167
    %v169 = vld [vmem:[%s127 + $0x2] sm:$0x1]
    %v170 = vld [vmem:[%s129 + $0x2] sm:$0x1]
    %v171 = vld [vmem:[%s84] sm:$0xf]
    %v172 = vld [vmem:[%s84 + $0x4] sm:$0xf]
    %v173 = vlaneseq
    %v174 = vshrl.u32 %v173, 7
    %v175 = vsub.s32 0, %v174
    %v176 = vrot.slane %v169, %v175
    %v177 = vmul.f32 %v176, %v171
    %v178 = vlaneseq
    %v179 = vshrl.u32 %v178, 7
    %v180 = vsub.s32 0, %v179
    %v181 = vrot.slane %v170, %v180
    %v182 = vmul.f32 %v181, %v172
    %v183 = vsub.f32 %v177, %v182
    %v184 = vadd.f32 %v164, %v183
    %v185 = vmul.f32 %v181, %v171
    %v186 = vmul.f32 %v176, %v172
    %v187 = vadd.f32 %v185, %v186
    %v188 = vadd.f32 %v168, %v187
    %v189 = vld [vmem:[%s127 + $0x3] sm:$0x1]
    %v190 = vld [vmem:[%s129 + $0x3] sm:$0x1]
    %v191 = vld [vmem:[%s105] sm:$0xf]
    %v192 = vld [vmem:[%s105 + $0x4] sm:$0xf]
    %v193 = vlaneseq
    %v194 = vshrl.u32 %v193, 7
    %v195 = vsub.s32 0, %v194
    %v196 = vrot.slane %v189, %v195
    %v197 = vmul.f32 %v196, %v191
    %v198 = vlaneseq
    %v199 = vshrl.u32 %v198, 7
    %v200 = vsub.s32 0, %v199
    %v201 = vrot.slane %v190, %v200
    %v202 = vmul.f32 %v201, %v192
    %v203 = vsub.f32 %v197, %v202
    %v204 = vadd.f32 %v184, %v203
    %v205 = vmul.f32 %v201, %v191
    %v206 = vmul.f32 %v196, %v192
    %v207 = vadd.f32 %v205, %v206
    %v208 = vadd.f32 %v188, %v207
    %s209 = scalar_lea.vmem [#allocation7], 8
    %210 = vst [vmem:[%s209] sm:$0xf] %v204
    %s211 = scalar_lea.vmem [#allocation7], 12
    %212 = vst [vmem:[%s211] sm:$0xf] %v208
    // Predicated region
    $region18: #{tpu_custom_call.1} parent=1 // pred_check
      _
    $region19: #{tpu_custom_call.1} parent=1 // pred_check_branch
      %214 = sbr.rel (0) target = $region21
    $region20: #{tpu_custom_call.1} parent=1 // pred_region
      %s216 = ssub.s32 256, 256
      %217 = vsyncadd [#allocation4], %s216
      %s218 = sshll.u32 [#allocation7], 4
      %s219 = int_to_ptr.vmem [resolvable:$true] %s218
      %224 = dma.vmem_to_hbm [thread:$0]  %s219, 256, %s2, [#allocation4], 64, 64, 4
    $region21: #{tpu_custom_call.1} parent=1 // pred_fallthru
      _
    // Predicated region
    $region22: #{tpu_custom_call.1} parent=1 // pred_check
      _
    $region23: #{tpu_custom_call.1} parent=1 // pred_check_branch
      %226 = sbr.rel (0) target = $region25
    $region24: #{tpu_custom_call.1} parent=1 // pred_region
      %227 = dma.done [#allocation4], 256
    $region25: #{tpu_custom_call.1} parent=1 // pred_fallthru
      _
    %228 = vsyncpa [#allocation3], 1
    %229 = vsyncpa [#allocation6], 1
    %230 = vsyncpa [#allocation4], 1

</llo_original>
